<compile_context>
chip_gen: v6e
topology: v6e:2x2x1
jax: 0.10.0
libtpu: 0.0.40
codegen_flags: <defaults>
</compile_context>

<pallas_src>
import math
from functools import partial

import jax
import jax.numpy as jnp
import numpy as np
from jax.experimental import pallas as pl
from jax.experimental.pallas import tpu as pltpu


def _round_up(x: int, m: int) -> int:
    return (x + m - 1) // m * m


def _lane_packing(dim: int):
    """k rows packed side by side so the stored last dim is a multiple of 128."""
    k = 128 // math.gcd(dim, 128)          # == lcm(dim, 128) // dim
    packed_dim = dim * k
    if packed_dim > 2048:                  # degenerate dims: keep it unpacked
        return 1, dim
    return k, packed_dim


@partial(jax.jit, static_argnums=(0, 1, 2, 5))
def _rotary_angle_table(max_seq_len, dim, base, offset, ntk_alpha,
                        tile_bytes=4 << 20):
    """(max_seq_len, dim) f32 angle table for positions [offset, offset+max_seq_len).

    `offset` (int) and `ntk_alpha` (float) are traced runtime values; only
    max_seq_len / dim / base / tile_bytes are compile-time static.
    """
    rows = int(max_seq_len)
    k, packed_dim = _lane_packing(dim)
    packed_rows = pl.cdiv(rows, k)

    # ---- tiling: exact output rows, >=2 tiles when the table is non-trivial ----
    block_rows = max(8, (tile_bytes // (packed_dim * 4)) // 8 * 8)
    if packed_rows <= 8:
        t_rows = packed_rows               # single block == full array dims
    else:
        num_tiles = max(2, pl.cdiv(packed_rows, block_rows))
        t_rows = _round_up(pl.cdiv(packed_rows, num_tiles), 8)
    grid = (pl.cdiv(packed_rows, t_rows),)

    # ---- per-lane constants (hoisted out of the kernel) ----
    eff_base = base * ntk_alpha ** (dim / (dim - 2))
    inv_freq = 1.0 / (eff_base ** (jnp.arange(0, dim, 2, dtype=jnp.float32) / dim))
    inv_dup = jnp.concatenate([inv_freq, inv_freq], axis=-1)          # (dim,)
    inv_packed = jnp.tile(inv_dup, k)                                 # (packed_dim,)
    lane_row = (np.arange(packed_dim) // dim).astype(np.float32)      # c // dim
    consts = jnp.stack(
        [inv_packed,                               # row 0: inv
         inv_packed * np.float32(k),               # row 1: k * inv (per packed row)
         jnp.asarray(lane_row) * inv_packed],      # row 2: (c // dim) * inv
        axis=0).astype(jnp.float32)                # (3, packed_dim)

    off = jnp.asarray(offset, dtype=jnp.int32).reshape((1,))          # SMEM scalar

    def kernel(off_ref, c_ref, out_ref):
        i = pl.program_id(0)
        c = c_ref[...]                             # (3, packed_dim)
        inv, kinv, bias = c[0:1, :], c[1:2, :], c[2:3, :]
        # logical position of packed element (r, c) =
        #   offset + (i*t_rows + r)*k + c//dim
        base_pos = (off_ref[0] + i * (t_rows * k)).astype(jnp.float32)
        lane_vec = base_pos * inv + bias           # (1, packed_dim)
        r = jax.lax.broadcasted_iota(jnp.int32, (t_rows, packed_dim), 0)
        out_ref[...] = r.astype(jnp.float32) * kinv + lane_vec

    cost = pl.CostEstimate(
        flops=3 * packed_rows * packed_dim,
        transcendentals=0,
        bytes_accessed=packed_rows * packed_dim * 4 + 3 * packed_dim * 4 + 4)

    packed = pl.pallas_call(
        kernel,
        out_shape=jax.ShapeDtypeStruct((packed_rows, packed_dim), jnp.float32),
        grid_spec=pltpu.PrefetchScalarGridSpec(
            num_scalar_prefetch=1,
            grid=grid,
            in_specs=[pl.BlockSpec((3, packed_dim), lambda i, off: (0, 0))],
            out_specs=pl.BlockSpec((t_rows, packed_dim), lambda i, off: (i, 0)),
        ),
        compiler_params=pltpu.CompilerParams(
            dimension_semantics=("parallel",)),
        cost_estimate=cost,
    )(off, consts)

    # Row-major (packed_rows, k*dim) == (packed_rows*k, dim): free reshape.
    emb = packed.reshape(packed_rows * k, dim)
    if packed_rows * k != rows:                    # <= (k-1)-row trim only
        emb = emb[:rows]
    return emb


class RotaryEmbedding:
    """JAX/Pallas port of Qwen's RotaryEmbedding (forward semantics only)."""

    def __init__(self, dim, base=10000):
        self.dim = int(dim)
        self.base = float(base)

    def __call__(self, max_seq_len, offset=0, ntk_alpha=1.0):
        # offset / ntk_alpha are runtime values: no recompile per decode step.
        emb = _rotary_angle_table(int(max_seq_len), self.dim, self.base,
                                  jnp.asarray(offset, dtype=jnp.int32),
                                  jnp.asarray(ntk_alpha, dtype=jnp.float32))
        # rearrange 'n d -> 1 n 1 d' (offset slice already folded into kernel)
        return emb.reshape(1, int(max_seq_len), 1, self.dim)


def _reference(max_seq_len, dim, base, offset=0, ntk_alpha=1.0):
    seqlen = max_seq_len + offset
    eff_base = base * ntk_alpha ** (dim / (dim - 2))
    inv_freq = 1.0 / eff_base ** (np.arange(0, dim, 2, dtype=np.float64) / dim)
    seq = np.arange(seqlen, dtype=np.float64)
    freqs = np.outer(seq, inv_freq)
    emb = np.concatenate([freqs, freqs], axis=-1).reshape(1, seqlen, 1, dim)
    return emb[:, offset:offset + max_seq_len]


if __name__ == "__main__":
    # forward() takes only scalar args; PRNGKey created for protocol completeness.
    _ = jax.random.PRNGKey(0)

    # Case 1: dim=32 (k=4 lane packing), no offset, tiny table (single block).
    rope32 = RotaryEmbedding(32, base=10000)
    out = jax.block_until_ready(rope32(8, offset=0, ntk_alpha=1.0))
    ref = _reference(8, 32, 10000.0, offset=0, ntk_alpha=1.0)
    assert out.shape == (1, 8, 1, 32), out.shape
    np.testing.assert_allclose(np.asarray(out, np.float64), ref, rtol=1e-5, atol=1e-6)

    # Case 2: runtime offset + ntk_alpha reuse the SAME compiled executable.
    out2 = jax.block_until_ready(rope32(8, offset=5, ntk_alpha=2.0))
    ref2 = _reference(8, 32, 10000.0, offset=5, ntk_alpha=2.0)
    assert out2.shape == (1, 8, 1, 32), out2.shape
    np.testing.assert_allclose(np.asarray(out2, np.float64), ref2, rtol=1e-5, atol=1e-6)

    # Case 3: multi-tile grid, partial last block, and a (k-1)-row trim (201 % 4 != 0).
    out3 = jax.block_until_ready(rope32(201, offset=7, ntk_alpha=1.0))
    ref3 = _reference(201, 32, 10000.0, offset=7, ntk_alpha=1.0)
    assert out3.shape == (1, 201, 1, 32), out3.shape
    np.testing.assert_allclose(np.asarray(out3, np.float64), ref3, rtol=1e-5, atol=1e-6)

    # Case 4: dim=96 -> generalized lane packing (k=4, packed_dim=384).
    rope96 = RotaryEmbedding(96, base=10000)
    out4 = jax.block_until_ready(rope96(17, offset=3, ntk_alpha=1.0))
    ref4 = _reference(17, 96, 10000.0, offset=3, ntk_alpha=1.0)
    assert out4.shape == (1, 17, 1, 96), out4.shape
    np.testing.assert_allclose(np.asarray(out4, np.float64), ref4, rtol=1e-5, atol=1e-6)

    print("KERNEL_OK")
</pallas_src>

<mosaic_0001>
module attributes {stable_mosaic.version = 11 : i64} {
  func.func @kernel(%arg0: i32, %arg1: memref<1xi32, #tpu.memory_space<smem>>, %arg2: memref<3x128xf32, #tpu.memory_space<vmem>>, %arg3: memref<2x128xf32, #tpu.memory_space<vmem>>) attributes {dimension_semantics = [#tpu.dimension_semantics<parallel>], iteration_bounds = array<i64: 1>, scalar_prefetch = 1 : i64, scratch_operands = 0 : i64, tpu.core_type = #tpu.core_type<tc>, window_params = [{pipeline_mode = #tpu.pipeline_mode<synchronous>, transform_indices = @transform_0, window_bounds = array<i64: 3, 128>}, {transform_indices = @transform_1, window_bounds = array<i64: 2, 128>}]} {
    %c0 = arith.constant 0 : index
    %c0_0 = arith.constant 0 : index
    %0 = vector.load %arg2[%c0, %c0_0] : memref<3x128xf32, #tpu.memory_space<vmem>>, vector<3x128xf32>
    %1 = vector.extract_strided_slice %0 {offsets = [0, 0], sizes = [1, 128], strides = [1, 1]} : vector<3x128xf32> to vector<1x128xf32>
    %2 = vector.extract_strided_slice %0 {offsets = [1, 0], sizes = [1, 128], strides = [1, 1]} : vector<3x128xf32> to vector<1x128xf32>
    %3 = vector.extract_strided_slice %0 {offsets = [2, 0], sizes = [1, 128], strides = [1, 1]} : vector<3x128xf32> to vector<1x128xf32>
    %c0_1 = arith.constant 0 : index
    %4 = memref.load %arg1[%c0_1] : memref<1xi32, #tpu.memory_space<smem>>
    %c8_i32 = arith.constant 8 : i32
    %5 = arith.muli %arg0, %c8_i32 : i32
    %6 = arith.addi %4, %5 : i32
    %7 = arith.sitofp %6 : i32 to f32
    %8 = vector.broadcast %7 : f32 to vector<1x128xf32>
    %9 = arith.mulf %8, %1 : vector<1x128xf32>
    %10 = arith.addf %9, %3 : vector<1x128xf32>
    %11 = tpu.iota {dimensions = array<i32: 0>} : vector<2x128xi32>
    %12 = arith.sitofp %11 : vector<2x128xi32> to vector<2x128xf32>
    %13 = vector.broadcast %2 : vector<1x128xf32> to vector<2x128xf32>
    %14 = arith.mulf %12, %13 : vector<2x128xf32>
    %15 = vector.broadcast %10 : vector<1x128xf32> to vector<2x128xf32>
    %16 = arith.addf %14, %15 : vector<2x128xf32>
    %c0_2 = arith.constant 0 : index
    %c0_3 = arith.constant 0 : index
    %17 = vector.load %arg3[%c0_2, %c0_3] : memref<2x128xf32, #tpu.memory_space<vmem>>, vector<2x128xf32>
    tpu.vector_store %arg3[%c0_2, %c0_3], %16 {strides = array<i32>} : memref<2x128xf32, #tpu.memory_space<vmem>>, vector<2x128xf32>,
    return
  }
  func.func @transform_0(%arg0: i32, %arg1: memref<1xi32, #tpu.memory_space<smem>>) -> (i32, i32) {
    %c0_i32 = arith.constant 0 : i32
    %c0_i32_0 = arith.constant 0 : i32
    %c0_i32_1 = arith.constant 0 : i32
    return %c0_i32, %c0_i32_0 : i32, i32
  }
  func.func @transform_1(%arg0: i32, %arg1: memref<1xi32, #tpu.memory_space<smem>>) -> (i32, i32) {
    %c0_i32 = arith.constant 0 : i32
    %c0_i32_0 = arith.constant 0 : i32
    return %arg0, %c0_i32 : i32, i32
  }
}

</mosaic_0001>

<llo_original>
// kernel: tile.9
$region0: #{tile.9}
  #allocation0 [shape = 's32[1]{0}', space=sflag, size = 0x4, scoped, tag = 'scoped memory for tile.9']
  %s0 = inlined_call_operand.vmem [shape: f32[32], index: 0, kind: input, shape index: {}]
  %s1 = inlined_call_operand.vmem [shape: f32[4,32], index: 1, kind: output, shape index: {}]
  // Predicated region
  $region2: #{tile.9} parent=0 // pred_check
    _
  $region3: #{tile.9} parent=0 // pred_check_branch
    %3 = sbr.rel (0) target = $region5
  $region4: #{tile.9} parent=0 // pred_region
    _
  $region5: #{tile.9} parent=0 // pred_fallthru
    _
  %v4 = vld [vmem:[%s0] ss:$0 sm:$0xff]
  %5 = vst [vmem:[%s1] sm:$0xf] %v4

// kernel: tile.11
$region0: #{tile.11}
  %s0 = inlined_call_operand.vmem [shape: f32[4,32], index: 0, kind: input, shape index: {}]
  %s1 = inlined_call_operand.vmem [shape: f32[1,128], index: 1, kind: output, shape index: {}]
  $region1: #{tile.11} parent=0
    #allocation0 [shape = 'u8[4096]{0}', space=vmem, size = 0x1000, scoped, tag = 'scoped mem for output reshape']
    #allocation1 [shape = 'u8[4096]{0}', space=vmem, size = 0x1000, scoped, tag = 'scoped mem for input reshape']
    %s3 = sshll.u32 1, 4
    %s4 = ssub.s32 %s3, 1
    %v5 = vld [vmem:[%s0] sm:%s4]
    %6 = vst [vmem:[#allocation1] sm:%s4] %v5
    %v7 = vld [vmem:[#allocation1] sm:$0x1]
    %vm8 = vcmask 261120
    %9 = vst.msk [vmem:[#allocation0] sm:$0x1] %vm8, %v7
    %s10 = scalar_lea.vmem [#allocation1], 3
    %v11 = vld [vmem:[%s10] sm:$0x1]
    %12 = vrot.lane.b32.xlu0 %v11, 96
    %v13 = vpop.permute.xlu0 %12
    %vm14 = vcmask 1048320
    %15 = vst.msk [vmem:[#allocation0] sm:$0x1] %vm14, %v13
    %s16 = scalar_lea.vmem [#allocation1], 2
    %v17 = vld [vmem:[%s16] sm:$0x1]
    %18 = vrot.lane.b32.xlu0 %v17, 64
    %v19 = vpop.permute.xlu0 %18
    %vm20 = vcmask 785920
    %21 = vst.msk [vmem:[#allocation0] sm:$0x1] %vm20, %v19
    %s22 = scalar_lea.vmem [#allocation1], 1
    %v23 = vld [vmem:[%s22] sm:$0x1]
    %24 = vrot.lane.b32.xlu0 %v23, 32
    %v25 = vpop.permute.xlu0 %24
    %vm26 = vcmask 523520
    %27 = vst.msk [vmem:[#allocation0] sm:$0x1] %vm26, %v25
    %s29 = sshll.u32 1, 1
    %s30 = ssub.s32 %s29, 1
    %v32 = vld [vmem:[#allocation0] sm:%s30]
    %s33 = sshll.u32 1, 1
    %s34 = ssub.s32 %s33, 1
    %35 = vst [vmem:[%s1] sm:%s34] %v32

// kernel: _rotary_angle_table.1
$region0: #{_rotary_angle_table.1}
  #allocation0 [shape = 'u32[]', space=smem, size = 0x4, offset = 0x4, fixed_abs, tag = 'smem constant byte address 0x4 - core index']
  #allocation1 [shape = 'u32[144,128]{1,0:T(1,128)}', space=vmem, size = 0x12000, scoped, tag = 'internal scratch']
  #allocation2 [shape = 's32[1]{0}', space=sflag, size = 0x4, scoped, tag = 'scoped memory for _rotary_angle_table.1']
  #allocation3 [shape = 's32[1]{0:T(128)S(6)}', space=smem, size = 0x200, scoped, tag = 'prefetched SMEM operand 0']
  %s0 = inlined_call_operand.<no memory space> [shape: s32[1], index: 0, kind: input, shape index: {}]
  %s1 = inlined_call_operand.vmem [shape: f32[3,128], index: 1, kind: input, shape index: {}]
  %s2 = inlined_call_operand.vmem [shape: f32[2,128], index: 2, kind: output, shape index: {}]
  %s3 = sld [smem:[#allocation0]]
  $region14: #{_rotary_angle_table.1} parent=0
    _
  %s5 = ssub.s32 1, %s3
  %s6 = scalar_select 0, %s5, %s3
  %7 = sst [smem:[#allocation3]] %s0
  // Predicated region
  $region2: #{_rotary_angle_table.1} parent=0 // pred_check
    _
  $region3: #{_rotary_angle_table.1} parent=0 // pred_check_branch
    %9 = sbr.rel (0) target = $region5
  $region4: #{_rotary_angle_table.1} parent=0 // pred_region
    _
  $region5: #{_rotary_angle_table.1} parent=0 // pred_fallthru
    _
  %v10 = vld [vmem:[%s1] sm:$0x7]
  %s11 = sld [smem:[#allocation3]]
  %s12 = smul.u32 0, 8
  %s13 = sadd.s32 %s11, %s12
  %s14 = scvt.s32.f32 %s13
  %v15 = vstv %s14
  %v16 = vmul.f32 %v15, %v10
  %v18 = vrot.slane %v10, 2
  %v20 = vadd.f32 %v16, %v18
  %v21 = vlaneseq
  %v22 = vshrl.u32 %v21, 7
  %v23 = vcvt.s32.f32 %v22
  %v24 = vlaneseq
  %v25 = vshrl.u32 %v24, 7
  %v26 = vsub.s32 1, %v25
  %v27 = vrot.slane %v10, %v26
  %v28 = vmul.f32 %v23, %v27
  %v29 = vlaneseq
  %v30 = vshrl.u32 %v29, 7
  %v31 = vsub.s32 0, %v30
  %v32 = vrot.slane %v20, %v31
  %v33 = vadd.f32 %v28, %v32
  %34 = vst [vmem:[%s2] sm:$0x3] %v33
  // Predicated region
  $region6: #{_rotary_angle_table.1} parent=0 // pred_check
    _
  $region7: #{_rotary_angle_table.1} parent=0 // pred_check_branch
    %36 = sbr.rel (0) target = $region9
  $region8: #{_rotary_angle_table.1} parent=0 // pred_region
    _
  $region9: #{_rotary_angle_table.1} parent=0 // pred_fallthru
    _
  // Predicated region
  $region10: #{_rotary_angle_table.1} parent=0 // pred_check
    _
  $region11: #{_rotary_angle_table.1} parent=0 // pred_check_branch
    %38 = sbr.rel (0) target = $region13
  $region12: #{_rotary_angle_table.1} parent=0 // pred_region
    _
  $region13: #{_rotary_angle_table.1} parent=0 // pred_fallthru
    _

</llo_original>
